<compile_context>
chip_gen: v5e
topology: v5e:2x2
jax: 0.10.0
libtpu: 0.0.40
codegen_flags: <defaults>
</compile_context>

<pallas_src>
import jax
import jax.numpy as jnp
from jax import lax
from jax.experimental import pallas as pl
from jax.experimental.pallas import tpu as pltpu


# ----------------------------------------------------------------------------------
# Kernel 1: packed transposed conv (one matmul per image) + per-batch BN partial stats
# ----------------------------------------------------------------------------------
def conv_t_kernel(x_ref, w_ref, b_ref, y_ref, stats_ref, xpad_ref):
    _, H, W, Cin = x_ref.shape

    # Zero-padded staging buffer (H+1, W+1, Cin): the four shifted views
    # x[m,n], x[m,n+1], x[m+1,n], x[m+1,n+1] become plain static slices.
    # Re-zeroed every grid step so the kernel is safe under a "parallel" grid
    # (each core owns its own scratch instance).
    xpad_ref[...] = jnp.zeros_like(xpad_ref)
    xpad_ref[:H, :W, :] = x_ref[0].astype(xpad_ref.dtype)

    x00 = xpad_ref[:H, :W, :]
    x01 = xpad_ref[:H, 1:, :]
    x10 = xpad_ref[1:, :W, :]
    x11 = xpad_ref[1:, 1:, :]

    # Packed operand (H, W, 4*Cin): single MXU push (K = 4*Cin, N = 4*Cp) instead of
    # nine tiny per-tap matmuls.
    xp = jnp.concatenate([x00, x01, x10, x11], axis=-1)
    y = jnp.einsum('hwc,cd->hwd', xp, w_ref[...],
                   preferred_element_type=jnp.float32)
    y = y + b_ref[0]

    # Direct lane-dense write of the parity-packed result [ee | eo | oe | oo].
    y_ref[0] = y

    # Per-batch partial sum / sum-of-squares over (H, W); parities folded in wrapper.
    s = jnp.sum(y, axis=(0, 1)).reshape(1, -1)
    sq = jnp.sum(y * y, axis=(0, 1)).reshape(1, -1)
    stats_ref[0] = jnp.concatenate([s, sq], axis=0)


# ----------------------------------------------------------------------------------
# Kernel 2: fused BatchNorm (precomputed scale/shift) + ReLU on the packed layout
# ----------------------------------------------------------------------------------
def bn_relu_kernel(y_ref, scale_ref, shift_ref, o_ref):
    o_ref[...] = jnp.maximum(y_ref[...] * scale_ref[0] + shift_ref[0], 0.0)


# ----------------------------------------------------------------------------------
# Wrapper: weight block-packing, pallas_calls, BN stats, layout glue
# ----------------------------------------------------------------------------------
def upsampler_block(x_nchw, w_pt, bias, gamma, beta, eps=1e-3,
                    matmul_dtype=jnp.float32):
    # matmul_dtype=jnp.bfloat16 is recommended on v6e/v7x (halves operand DMA bytes,
    # MXU-native); f32 default keeps numerics tight for the correctness check.
    N, Cin, H, W = x_nchw.shape
    Cout = w_pt.shape[1]
    Cp = ((Cout + 31) // 32) * 32          # pad Cout so 4*Cp % 128 == 0 (lane-dense)

    # NCHW -> NHWC.
    # TODO(synk): accept/return NHWC to drop the two full-array HBM transposes if the
    # surrounding model allows it.
    x = jnp.transpose(x_nchw, (0, 2, 3, 1)).astype(matmul_dtype)

    # Pack ConvTranspose2d weight (Cin, Cout, kH, kW) into a (4*Cin, 4*Cp) block matrix.
    #   row blocks   : [x(m,n) | x(m,n+1) | x(m+1,n) | x(m+1,n+1)]          (each Cin)
    #   column blocks: [out(2m,2n) | out(2m,2n+1) | out(2m+1,2n) | out(2m+1,2n+1)] (Cp)
    wt = jnp.transpose(w_pt.astype(jnp.float32), (2, 3, 0, 1))   # (kH, kW, Cin, Cout)
    zed = jnp.zeros((Cin, Cp), jnp.float32)

    def tap(kr, kc):
        return jnp.pad(wt[kr, kc], ((0, 0), (0, Cp - Cout)))

    w_block = jnp.concatenate([
        jnp.concatenate([tap(1, 1), tap(1, 2), tap(2, 1), tap(2, 2)], axis=1),
        jnp.concatenate([zed,       tap(1, 0), zed,       tap(2, 0)], axis=1),
        jnp.concatenate([zed,       zed,       tap(0, 1), tap(0, 2)], axis=1),
        jnp.concatenate([zed,       zed,       zed,       tap(0, 0)], axis=1),
    ], axis=0).astype(matmul_dtype)                               # (4*Cin, 4*Cp)

    b_pad = jnp.pad(bias.astype(jnp.float32), (0, Cp - Cout))
    b4 = jnp.tile(b_pad, 4).reshape(1, 4 * Cp)

    itm = jnp.dtype(matmul_dtype).itemsize
    conv_cost = pl.CostEstimate(
        flops=2 * N * H * W * (4 * Cin) * (4 * Cp),
        transcendentals=0,
        bytes_accessed=(N * H * W * Cin * itm + 16 * Cin * Cp * itm
                        + 4 * (4 * Cp + N * H * W * 4 * Cp + N * 2 * 4 * Cp)))

    # TODO(synk): for large images, tile H with a 1-row halo (grid=(N, cdiv(H, tH)))
    # so double-buffered blocks fit v7x's 64 MiB VMEM; whole-image blocks are fine at
    # these test sizes.
    conv_packed, stats = pl.pallas_call(
        conv_t_kernel,
        out_shape=(jax.ShapeDtypeStruct((N, H, W, 4 * Cp), jnp.float32),
                   jax.ShapeDtypeStruct((N, 2, 4 * Cp), jnp.float32)),
        grid=(N,),
        in_specs=[pl.BlockSpec((1, H, W, Cin), lambda n: (n, 0, 0, 0)),
                  pl.BlockSpec((4 * Cin, 4 * Cp), lambda n: (0, 0)),
                  pl.BlockSpec((1, 4 * Cp), lambda n: (0, 0))],
        out_specs=(pl.BlockSpec((1, H, W, 4 * Cp), lambda n: (n, 0, 0, 0)),
                   pl.BlockSpec((1, 2, 4 * Cp), lambda n: (n, 0, 0))),
        scratch_shapes=[pltpu.VMEM((H + 1, W + 1, Cin), matmul_dtype)],
        compiler_params=pltpu.CompilerParams(dimension_semantics=("parallel",)),
        cost_estimate=conv_cost,
    )(x, w_block, b4)

    # BatchNorm2d training-mode batch statistics (biased), folded over batch & parities.
    tot = jnp.sum(stats, axis=0)                         # (2, 4*Cp)
    s = tot[0].reshape(4, Cp).sum(axis=0)                # (Cp,)
    sq = tot[1].reshape(4, Cp).sum(axis=0)
    count = jnp.float32(N * 4 * H * W)                   # = N * (2H) * (2W)
    mean = s / count
    var = jnp.maximum(sq / count - mean * mean, 0.0)     # guard E[x^2]-E[x]^2 cancellation
    gamma_p = jnp.pad(gamma.astype(jnp.float32), (0, Cp - Cout))
    beta_p = jnp.pad(beta.astype(jnp.float32), (0, Cp - Cout))
    scale = gamma_p * lax.rsqrt(var + eps)
    shift = beta_p - mean * scale
    scale4 = jnp.tile(scale, 4).reshape(1, 4 * Cp)       # same per-channel scale per parity
    shift4 = jnp.tile(shift, 4).reshape(1, 4 * Cp)

    bn_cost = pl.CostEstimate(
        flops=3 * N * H * W * 4 * Cp, transcendentals=0,
        bytes_accessed=4 * (2 * N * H * W * 4 * Cp + 2 * 4 * Cp))

    y_bn = pl.pallas_call(
        bn_relu_kernel,
        out_shape=jax.ShapeDtypeStruct((N, H, W, 4 * Cp), jnp.float32),
        grid=(N,),
        in_specs=[pl.BlockSpec((1, H, W, 4 * Cp), lambda n: (n, 0, 0, 0)),
                  pl.BlockSpec((1, 4 * Cp), lambda n: (0, 0)),
                  pl.BlockSpec((1, 4 * Cp), lambda n: (0, 0))],
        out_specs=pl.BlockSpec((1, H, W, 4 * Cp), lambda n: (n, 0, 0, 0)),
        compiler_params=pltpu.CompilerParams(dimension_semantics=("parallel",)),
        cost_estimate=bn_cost,
    )(conv_packed, scale4, shift4)

    # Un-interleave parities + NCHW in ONE fused XLA transpose:
    # (N,H,W,4*Cp) -> (N,H,W,2,2,Cout) [free reshape + channel slice]
    #              -> (N,Cout,H,2,W,2) [single transpose] -> (N,Cout,2H,2W) [free reshape]
    y = y_bn.reshape(N, H, W, 2, 2, Cp)[..., :Cout]
    y = jnp.transpose(y, (0, 5, 1, 3, 2, 4))
    return y.reshape(N, Cout, 2 * H, 2 * W)
    # TODO(synk): BatchNorm running_mean/running_var bookkeeping (not part of the forward
    # output) omitted.


# ----------------------------------------------------------------------------------
# Pure-JAX reference (same math, used only as a sanity check)
# ----------------------------------------------------------------------------------
def reference(x_nchw, w_pt, bias, gamma, beta, eps=1e-3):
    # ConvTranspose2d == dilated-input conv with spatially flipped, transposed weight
    w_conv = jnp.transpose(jnp.flip(w_pt, axis=(2, 3)), (1, 0, 2, 3))   # OIHW
    conv = lax.conv_general_dilated(
        x_nchw, w_conv, window_strides=(1, 1),
        padding=((1, 2), (1, 2)), lhs_dilation=(2, 2),
        dimension_numbers=('NCHW', 'OIHW', 'NCHW')) + bias.reshape(1, -1, 1, 1)
    mean = conv.mean(axis=(0, 2, 3), keepdims=True)
    var = conv.var(axis=(0, 2, 3), keepdims=True)          # biased, like PyTorch BN training
    bn = gamma.reshape(1, -1, 1, 1) * (conv - mean) / jnp.sqrt(var + eps) + beta.reshape(1, -1, 1, 1)
    return jnp.maximum(bn, 0.0)


if __name__ == "__main__":
    key = jax.random.PRNGKey(0)
    k1, k2, k3, k4, k5 = jax.random.split(key, 5)

    N, Cin, Cout, H, W = 2, 4, 8, 16, 16
    x = jax.random.normal(k1, (N, Cin, H, W), dtype=jnp.float32)
    w = 0.1 * jax.random.normal(k2, (Cin, Cout, 3, 3), dtype=jnp.float32)   # ConvTranspose2d weight
    b = 0.1 * jax.random.normal(k3, (Cout,), dtype=jnp.float32)
    gamma = 1.0 + 0.1 * jax.random.normal(k4, (Cout,), dtype=jnp.float32)   # BN weight
    beta = 0.1 * jax.random.normal(k5, (Cout,), dtype=jnp.float32)          # BN bias

    out = upsampler_block(x, w, b, gamma, beta)
    out = jax.block_until_ready(out)

    assert out.shape == (N, Cout, 2 * H, 2 * W), out.shape

    ref = jax.block_until_ready(reference(x, w, b, gamma, beta))
    max_err = float(jnp.max(jnp.abs(out - ref)))
    assert max_err < 2e-2, f"mismatch vs reference: {max_err}"

    print("KERNEL_OK")
</pallas_src>

<mosaic_0001>
module attributes {stable_mosaic.version = 11 : i64} {
  func.func @conv_t_kernel(%arg0: i32, %arg1: memref<1x16x16x4xf32, #tpu.memory_space<vmem>>, %arg2: memref<16x128xf32, #tpu.memory_space<vmem>>, %arg3: memref<1x128xf32, #tpu.memory_space<vmem>>, %arg4: memref<1x16x16x128xf32, #tpu.memory_space<vmem>>, %arg5: memref<1x2x128xf32, #tpu.memory_space<vmem>>, %arg6: memref<17x17x4xf32, #tpu.memory_space<vmem>>) attributes {dimension_semantics = [#tpu.dimension_semantics<parallel>], iteration_bounds = array<i64: 2>, scalar_prefetch = 0 : i64, scratch_operands = 1 : i64, tpu.core_type = #tpu.core_type<tc>, window_params = [{transform_indices = @transform_0, window_bounds = array<i64: 1, 16, 16, 4>}, {pipeline_mode = #tpu.pipeline_mode<synchronous>, transform_indices = @transform_1, window_bounds = array<i64: 16, 128>}, {pipeline_mode = #tpu.pipeline_mode<synchronous>, transform_indices = @transform_2, window_bounds = array<i64: 1, 128>}, {transform_indices = @transform_3, window_bounds = array<i64: 1, 16, 16, 128>}, {transform_indices = @transform_4, window_bounds = array<i64: 1, 2, 128>}]} {
    %cst = arith.constant 0.000000e+00 : f32
    %0 = vector.broadcast %cst : f32 to vector<17x17x4xf32>
    %c0 = arith.constant 0 : index
    %c0_0 = arith.constant 0 : index
    %c0_1 = arith.constant 0 : index
    %1 = vector.load %arg6[%c0, %c0_0, %c0_1] : memref<17x17x4xf32, #tpu.memory_space<vmem>>, vector<17x17x4xf32>
    tpu.vector_store %arg6[%c0, %c0_0, %c0_1], %0 {strides = array<i32>} : memref<17x17x4xf32, #tpu.memory_space<vmem>>, vector<17x17x4xf32>,
    %c0_2 = arith.constant 0 : index
    %c0_3 = arith.constant 0 : index
    %c0_4 = arith.constant 0 : index
    %c0_5 = arith.constant 0 : index
    %2 = vector.load %arg1[%c0_2, %c0_3, %c0_4, %c0_5] : memref<1x16x16x4xf32, #tpu.memory_space<vmem>>, vector<1x16x16x4xf32>
    %3 = vector.shape_cast %2 : vector<1x16x16x4xf32> to vector<16x16x4xf32>
    %c0_6 = arith.constant 0 : index
    %c0_7 = arith.constant 0 : index
    %c0_8 = arith.constant 0 : index
    %4 = vector.load %arg6[%c0_6, %c0_7, %c0_8] : memref<17x17x4xf32, #tpu.memory_space<vmem>>, vector<16x16x4xf32>
    tpu.vector_store %arg6[%c0_6, %c0_7, %c0_8], %3 {strides = array<i32>} : memref<17x17x4xf32, #tpu.memory_space<vmem>>, vector<16x16x4xf32>,
    %c0_9 = arith.constant 0 : index
    %c0_10 = arith.constant 0 : index
    %c0_11 = arith.constant 0 : index
    %5 = vector.load %arg6[%c0_9, %c0_10, %c0_11] : memref<17x17x4xf32, #tpu.memory_space<vmem>>, vector<16x16x4xf32>
    %c0_12 = arith.constant 0 : index
    %c1 = arith.constant 1 : index
    %c0_13 = arith.constant 0 : index
    %6 = vector.load %arg6[%c0_12, %c1, %c0_13] : memref<17x17x4xf32, #tpu.memory_space<vmem>>, vector<16x16x4xf32>
    %c1_14 = arith.constant 1 : index
    %c0_15 = arith.constant 0 : index
    %c0_16 = arith.constant 0 : index
    %7 = vector.load %arg6[%c1_14, %c0_15, %c0_16] : memref<17x17x4xf32, #tpu.memory_space<vmem>>, vector<16x16x4xf32>
    %c1_17 = arith.constant 1 : index
    %c1_18 = arith.constant 1 : index
    %c0_19 = arith.constant 0 : index
    %8 = vector.load %arg6[%c1_17, %c1_18, %c0_19] : memref<17x17x4xf32, #tpu.memory_space<vmem>>, vector<16x16x4xf32>
    %9 = tpu.concatenate %5, %6, %7, %8 in 2 : vector<16x16x4xf32>, vector<16x16x4xf32>, vector<16x16x4xf32>, vector<16x16x4xf32> -> vector<16x16x16xf32>
    %c0_20 = arith.constant 0 : index
    %c0_21 = arith.constant 0 : index
    %10 = vector.load %arg2[%c0_20, %c0_21] : memref<16x128xf32, #tpu.memory_space<vmem>>, vector<16x128xf32>
    "tpu.trace_start"() <{level = 10 : i32, message = "hwc,cd->hwd"}> : () -> ()
    %cst_22 = arith.constant dense<0.000000e+00> : vector<16x16x128xf32>
    %11 = tpu.matmul %9, %10, %cst_22 {dimension_numbers = #tpu.dot_dimension_numbers<[2], [0], [0, 1], [1], [0, 0, 0, 1, 1, 1], [], []>} : vector<16x16x16xf32>, vector<16x128xf32>, vector<16x16x128xf32> -> vector<16x16x128xf32>
    "tpu.trace_stop"() : () -> ()
    %c0_23 = arith.constant 0 : index
    %c0_24 = arith.constant 0 : index
    %12 = vector.load %arg3[%c0_23, %c0_24] : memref<1x128xf32, #tpu.memory_space<vmem>>, vector<1x128xf32>
    %13 = vector.shape_cast %12 : vector<1x128xf32> to vector<128xf32>
    %14 = vector.shape_cast %13 : vector<128xf32> to vector<1x1x128xf32>
    %15 = vector.broadcast %14 : vector<1x1x128xf32> to vector<16x16x128xf32>
    %16 = arith.addf %11, %15 : vector<16x16x128xf32>
    %c0_25 = arith.constant 0 : index
    %c0_26 = arith.constant 0 : index
    %c0_27 = arith.constant 0 : index
    %c0_28 = arith.constant 0 : index
    %17 = vector.load %arg4[%c0_25, %c0_26, %c0_27, %c0_28] : memref<1x16x16x128xf32, #tpu.memory_space<vmem>>, vector<1x16x16x128xf32>
    %18 = vector.shape_cast %17 : vector<1x16x16x128xf32> to vector<16x16x128xf32>
    %19 = vector.shape_cast %16 : vector<16x16x128xf32> to vector<1x16x16x128xf32>
    tpu.vector_store %arg4[%c0_25, %c0_26, %c0_27, %c0_28], %19 {strides = array<i32>} : memref<1x16x16x128xf32, #tpu.memory_space<vmem>>, vector<1x16x16x128xf32>,
    %cst_29 = arith.constant dense<0.000000e+00> : vector<128xf32>
    %20 = vector.multi_reduction <add>, %16, %cst_29 [0, 1] : vector<16x16x128xf32> to vector<128xf32>
    %21 = vector.shape_cast %20 : vector<128xf32> to vector<1x128xf32>
    %22 = arith.mulf %16, %16 : vector<16x16x128xf32>
    %cst_30 = arith.constant dense<0.000000e+00> : vector<128xf32>
    %23 = vector.multi_reduction <add>, %22, %cst_30 [0, 1] : vector<16x16x128xf32> to vector<128xf32>
    %24 = vector.shape_cast %23 : vector<128xf32> to vector<1x128xf32>
    %25 = tpu.concatenate %21, %24 in 0 : vector<1x128xf32>, vector<1x128xf32> -> vector<2x128xf32>
    %c0_31 = arith.constant 0 : index
    %c0_32 = arith.constant 0 : index
    %c0_33 = arith.constant 0 : index
    %26 = vector.load %arg5[%c0_31, %c0_32, %c0_33] : memref<1x2x128xf32, #tpu.memory_space<vmem>>, vector<1x2x128xf32>
    %27 = vector.shape_cast %26 : vector<1x2x128xf32> to vector<2x128xf32>
    %28 = vector.shape_cast %25 : vector<2x128xf32> to vector<1x2x128xf32>
    tpu.vector_store %arg5[%c0_31, %c0_32, %c0_33], %28 {strides = array<i32>} : memref<1x2x128xf32, #tpu.memory_space<vmem>>, vector<1x2x128xf32>,
    return
  }
  func.func @transform_0(%arg0: i32) -> (i32, i32, i32, i32) {
    %c0_i32 = arith.constant 0 : i32
    %c0_i32_0 = arith.constant 0 : i32
    %c0_i32_1 = arith.constant 0 : i32
    %c0_i32_2 = arith.constant 0 : i32
    return %arg0, %c0_i32, %c0_i32_0, %c0_i32_1 : i32, i32, i32, i32
  }
  func.func @transform_1(%arg0: i32) -> (i32, i32) {
    %c0_i32 = arith.constant 0 : i32
    %c0_i32_0 = arith.constant 0 : i32
    %c0_i32_1 = arith.constant 0 : i32
    return %c0_i32, %c0_i32_0 : i32, i32
  }
  func.func @transform_2(%arg0: i32) -> (i32, i32) {
    %c0_i32 = arith.constant 0 : i32
    %c0_i32_0 = arith.constant 0 : i32
    %c0_i32_1 = arith.constant 0 : i32
    return %c0_i32, %c0_i32_0 : i32, i32
  }
  func.func @transform_3(%arg0: i32) -> (i32, i32, i32, i32) {
    %c0_i32 = arith.constant 0 : i32
    %c0_i32_0 = arith.constant 0 : i32
    %c0_i32_1 = arith.constant 0 : i32
    %c0_i32_2 = arith.constant 0 : i32
    return %arg0, %c0_i32, %c0_i32_0, %c0_i32_1 : i32, i32, i32, i32
  }
  func.func @transform_4(%arg0: i32) -> (i32, i32, i32) {
    %c0_i32 = arith.constant 0 : i32
    %c0_i32_0 = arith.constant 0 : i32
    %c0_i32_1 = arith.constant 0 : i32
    return %arg0, %c0_i32, %c0_i32_0 : i32, i32, i32
  }
}

</mosaic_0001>

<llo_original>
// kernel: tpu_custom_call.1
$region0: #{tpu_custom_call.1}
  #allocation0 [shape = 'u32[]', space=smem, size = 0x4, offset = 0x4, fixed_abs, tag = 'smem constant byte address 0x4 - core index']
  #allocation1 [shape = 'u32[72,128]{1,0:T(1,128)}', space=vmem, size = 0x9000, scoped, tag = 'internal scratch']
  #allocation2 [shape = 'f32[17,17,4]{2,1,0:T(8,128)}', space=vmem, size = 0x33000, scoped, tag = 'scratch operand']
  %s0 = inlined_call_operand.vmem [shape: f32[2,16,16,4], index: 0, kind: input, shape index: {}]
  %s1 = inlined_call_operand.vmem [shape: f32[16,128], index: 1, kind: input, shape index: {}]
  %s2 = inlined_call_operand.vmem [shape: f32[1,128], index: 2, kind: input, shape index: {}]
  %s3 = inlined_call_operand.hbm [shape: f32[2,16,16,128], index: 3, kind: output, shape index: {0}]
  %s4 = inlined_call_operand.hbm [shape: f32[2,2,128], index: 4, kind: output, shape index: {1}]
  %5 = xla_tuple %s3, %s4
  %s6 = sld [smem:[#allocation0]]
  $region53: #{tpu_custom_call.1} parent=0
    _
  %s8 = ssub.s32 1, %s6
  %s9 = scalar_select 0, %s8, %s6
  $region1: #{tpu_custom_call.1} parent=0
    #allocation3 [shape = 'u8[262144]{0}', space=vmem, size = 0x40000, scoped, tag = 'output window, operand 0']
    #allocation4 [shape = 's32[2]{0}', space=sflag, size = 0x8, scoped, tag = 'scoped memory for tpu_custom_call.1']
    #allocation5 [shape = 'u8[2048]{0}', space=vmem, size = 0x800, scoped, tag = 'output window, operand 1']
    #allocation6 [shape = 's32[2]{0}', space=sflag, size = 0x8, scoped, tag = 'scoped memory for tpu_custom_call.1']
    %10 = vsyncpa [#allocation4], 0
    %s11 = scalar_lea.sflag [#allocation4], 1
    %12 = vsyncpa %s11, 0
    %13 = vsyncpa [#allocation6], 0
    %s14 = scalar_lea.sflag [#allocation6], 1
    %15 = vsyncpa %s14, 0
    loop: start=0, step=1, limit=4
    $region2: #{tpu_custom_call.1} parent=1 // loop_pre_header
      _
    $region3: #{tpu_custom_call.1} parent=1 // loop_header
      %s17 = sphi 0, %s21
      %p18 = scmp.ge.s32.totalorder %s17, 4
      %s27 = sphi 0, %s29
      %s30 = sphi 0, %s27
      %s31 = sphi 0, %s30
      %s47 = sphi 0, %s31
      %s51 = sphi 0, %s51
      %s53 = sphi 0, %s51
      %s54 = sphi 0, %s53
      %s68 = sphi 0, %s54
      %s72 = sphi 0, %s72
      %s74 = sphi 0, %s72
      %s75 = sphi 0, %s74
      %s89 = sphi 0, %s75
      %s95 = sphi 0, %s97
      %s98 = sphi 0, %s95
      %s99 = sphi 0, %s98
      %s115 = sphi 0, %s99
      %s121 = sphi 0, %s123
      %s124 = sphi 0, %s121
      %s125 = sphi 0, %s124
      %s141 = sphi 0, %s125
    $region4: #{tpu_custom_call.1} parent=1 // loop_header_branch
      %20 = sbr.rel (%p18) target = $region8
    $region5: #{tpu_custom_call.1} parent=1 // loop_body
      %s22 = ssub.s32 %s17, 1
      %s23 = ssub.s32 %s17, 2
      %s24 = sadd.s32 %s17, 1
      %s25 = ssub.s32 %s17, %s24
      %p26 = scmp.eq.s32.totalorder %s25, 0
      %s28 = sadd.s32 %s27, 1
      %s29 = scalar_select %p26, %s27, %s28
      %p32 = pneg %p26
      %p33 = scmp.eq.s32.totalorder %s17, 1
      %p34 = por %p32, %p33
      %p35 = scmp.ne.s32.totalorder %s27, %s30
      %p36 = scmp.eq.s32.totalorder %s17, 0
      %p37 = por %p35, %p36
      %p38 = scmp.ne.s32.totalorder %s27, %s30
      %p39 = scmp.eq.s32.totalorder %s22, 1
      %p40 = por %p38, %p39
      %p41 = scmp.ne.s32.totalorder %s30, %s31
      %p42 = scmp.eq.s32.totalorder %s22, 0
      %p43 = por %p41, %p42
      %p44 = scmp.ne.s32.totalorder %s30, %s31
      %p45 = scmp.eq.s32.totalorder %s23, 1
      %p46 = por %p44, %p45
      %p48 = scmp.ne.s32.totalorder %s31, %s47
      %p49 = scmp.eq.s32.totalorder %s23, 0
      %p50 = por %p48, %p49
      %s52 = sadd.s32 %s51, 1
      %p55 = scmp.eq.s32.totalorder %s17, 1
      %p56 = scmp.ne.s32.totalorder %s51, %s53
      %p57 = scmp.eq.s32.totalorder %s17, 0
      %p58 = por %p56, %p57
      %p59 = scmp.ne.s32.totalorder %s51, %s53
      %p60 = scmp.eq.s32.totalorder %s22, 1
      %p61 = por %p59, %p60
      %p62 = scmp.ne.s32.totalorder %s53, %s54
      %p63 = scmp.eq.s32.totalorder %s22, 0
      %p64 = por %p62, %p63
      %p65 = scmp.ne.s32.totalorder %s53, %s54
      %p66 = scmp.eq.s32.totalorder %s23, 1
      %p67 = por %p65, %p66
      %p69 = scmp.ne.s32.totalorder %s54, %s68
      %p70 = scmp.eq.s32.totalorder %s23, 0
      %p71 = por %p69, %p70
      %s73 = sadd.s32 %s72, 1
      %p76 = scmp.eq.s32.totalorder %s17, 1
      %p77 = scmp.ne.s32.totalorder %s72, %s74
      %p78 = scmp.eq.s32.totalorder %s17, 0
      %p79 = por %p77, %p78
      %p80 = scmp.ne.s32.totalorder %s72, %s74
      %p81 = scmp.eq.s32.totalorder %s22, 1
      %p82 = por %p80, %p81
      %p83 = scmp.ne.s32.totalorder %s74, %s75
      %p84 = scmp.eq.s32.totalorder %s22, 0
      %p85 = por %p83, %p84
      %p86 = scmp.ne.s32.totalorder %s74, %s75
      %p87 = scmp.eq.s32.totalorder %s23, 1
      %p88 = por %p86, %p87
      %p90 = scmp.ne.s32.totalorder %s75, %s89
      %p91 = scmp.eq.s32.totalorder %s23, 0
      %p92 = por %p90, %p91
      %s93 = ssub.s32 %s17, %s24
      %p94 = scmp.eq.s32.totalorder %s93, 0
      %s96 = sadd.s32 %s95, 1
      %s97 = scalar_select %p94, %s95, %s96
      %p100 = pneg %p94
      %p101 = scmp.eq.s32.totalorder %s17, 1
      %p102 = por %p100, %p101
      %p103 = scmp.ne.s32.totalorder %s95, %s98
      %p104 = scmp.eq.s32.totalorder %s17, 0
      %p105 = por %p103, %p104
      %p106 = scmp.ne.s32.totalorder %s95, %s98
      %p107 = scmp.eq.s32.totalorder %s22, 1
      %p108 = por %p106, %p107
      %p109 = scmp.ne.s32.totalorder %s98, %s99
      %p110 = scmp.eq.s32.totalorder %s22, 0
      %p111 = por %p109, %p110
      %p112 = scmp.ne.s32.totalorder %s98, %s99
      %p113 = scmp.eq.s32.totalorder %s23, 1
      %p114 = por %p112, %p113
      %p116 = scmp.ne.s32.totalorder %s99, %s115
      %p117 = scmp.eq.s32.totalorder %s23, 0
      %p118 = por %p116, %p117
      %s119 = ssub.s32 %s17, %s24
      %p120 = scmp.eq.s32.totalorder %s119, 0
      %s122 = sadd.s32 %s121, 1
      %s123 = scalar_select %p120, %s121, %s122
      %p126 = pneg %p120
      %p127 = scmp.eq.s32.totalorder %s17, 1
      %p128 = por %p126, %p127
      %p129 = scmp.ne.s32.totalorder %s121, %s124
      %p130 = scmp.eq.s32.totalorder %s17, 0
      %p131 = por %p129, %p130
      %p132 = scmp.ne.s32.totalorder %s121, %s124
      %p133 = scmp.eq.s32.totalorder %s22, 1
      %p134 = por %p132, %p133
      %p135 = scmp.ne.s32.totalorder %s124, %s125
      %p136 = scmp.eq.s32.totalorder %s22, 0
      %p137 = por %p135, %p136
      %p138 = scmp.ne.s32.totalorder %s124, %s125
      %p139 = scmp.eq.s32.totalorder %s23, 1
      %p140 = por %p138, %p139
      %p142 = scmp.ne.s32.totalorder %s125, %s141
      %p143 = scmp.eq.s32.totalorder %s23, 0
      %p144 = por %p142, %p143
      %p145 = scmp.le.s32.totalorder 1, %s17
      %p146 = scmp.lt.s32.totalorder %s17, 3
      %p147 = pnand %p145, %p146
      %p148 = pneg %p147
      // Predicated region
      $region9: #{tpu_custom_call.1} parent=5 // pred_check
        _
      $region10: #{tpu_custom_call.1} parent=5 // pred_check_branch
        %150 = sbr.rel (%p147) target = $region12
      $region11: #{tpu_custom_call.1} parent=5 // pred_region
        %s151 = ssub.s32 %s17, 1
        // Predicated region
        $region13: #{tpu_custom_call.1} parent=11 // pred_check
          %p152 = pneg %p64
        $region14: #{tpu_custom_call.1} parent=11 // pred_check_branch
          %154 = sbr.rel (%p152) target = $region16
        $region15: #{tpu_custom_call.1} parent=11 // pred_region
          _
        $region16: #{tpu_custom_call.1} parent=11 // pred_fallthru
          _
        // Predicated region
        $region17: #{tpu_custom_call.1} parent=11 // pred_check
          %p155 = pneg %p85
        $region18: #{tpu_custom_call.1} parent=11 // pred_check_branch
          %157 = sbr.rel (%p155) target = $region20
        $region19: #{tpu_custom_call.1} parent=11 // pred_region
          _
        $region20: #{tpu_custom_call.1} parent=11 // pred_fallthru
          _
      $region12: #{tpu_custom_call.1} parent=5 // pred_fallthru
        _
      %p158 = scmp.lt.s32.totalorder %s17, 2
      // Predicated region
      $region21: #{tpu_custom_call.1} parent=5 // pred_check
        %p159 = pneg %p158
      $region22: #{tpu_custom_call.1} parent=5 // pred_check_branch
        %161 = sbr.rel (%p159) target = $region24
      $region23: #{tpu_custom_call.1} parent=5 // pred_region
        // Predicated region
        $region25: #{tpu_custom_call.1} parent=23 // pred_check
          %p162 = pneg %p37
        $region26: #{tpu_custom_call.1} parent=23 // pred_check_branch
          %164 = sbr.rel (%p162) target = $region28
        $region27: #{tpu_custom_call.1} parent=23 // pred_region
          %p165 = scmp.lt.s32.totalorder %s17, 1
          %s166 = scalar_select %p165, %s17, 1
          %s167 = smul.addr %s166, 32
          %s168 = smul.addr %s167, 8
          %s169 = scalar_lea.vmem %s0, %s168
        $region28: #{tpu_custom_call.1} parent=23 // pred_fallthru
          _
      $region24: #{tpu_custom_call.1} parent=5 // pred_fallthru
        _
      %p170 = scmp.le.s32.totalorder 1, %s17
      %p171 = scmp.lt.s32.totalorder %s17, 3
      %p172 = pnand %p170, %p171
      %p173 = pneg %p172
      // Predicated region
      $region29: #{tpu_custom_call.1} parent=5 // pred_check
        _
      $region30: #{tpu_custom_call.1} parent=5 // pred_check_branch
        %175 = sbr.rel (%p172) target = $region32
      $region31: #{tpu_custom_call.1} parent=5 // pred_region
        %s176 = ssub.s32 %s17, 1
        %p177 = scmp.lt.s32.totalorder %s22, 1
        %s178 = scalar_select %p177, %s22, 1
        %s179 = smul.addr %s178, 32
        %s180 = smul.addr %s179, 8
        %s181 = scalar_lea.vmem %s0, %s180
        %p182 = pneg %p43
        %p183 = pneg %p40
        %p184 = pneg %p64
        %p185 = pneg %p61
        %p186 = pneg %p85
        %p187 = pneg %p82
        %p188 = pneg %p111
        %p189 = pneg %p108
        %s190 = sand.u32 %s98, 1
        %s191 = scalar_lea.sflag [#allocation4], %s190
        %s192 = sand.u32 %s98, 1
        %s193 = smul.addr %s192, 256
        %s194 = scalar_lea.vmem [#allocation3], %s193
        %p195 = pneg %p137
        %p196 = pneg %p134
        %s197 = sand.u32 %s124, 1
        %s198 = scalar_lea.sflag [#allocation6], %s197
        %s199 = sand.u32 %s124, 1
        %s200 = smul.addr %s199, 2
        %s201 = scalar_lea.vmem [#allocation5], %s200
        %p202 = scmp.lt.s32.totalorder %s22, 1
        %s203 = scalar_select %p202, %s22, 1
        %s204 = smul.addr %s203, 32
        %s205 = smul.addr %s204, 8
        %s206 = scalar_lea.vmem %s0, %s205
        %vm207 = vcmask 31744
        %208 = vst.msk [vmem:[#allocation2] sm:$0xff] %vm207, 0.0
        %209 = vst.msk [vmem:[#allocation2 + $0x8] sm:$0xff] %vm207, 0.0
        %vm210 = vcmask 24576
        %211 = vst.msk [vmem:[#allocation2 + $0x10] sm:$0x1] %vm210, 0.0
        %212 = vst.msk [vmem:[#allocation2 + $0x18] sm:$0xff] %vm207, 0.0
        %213 = vst.msk [vmem:[#allocation2 + $0x20] sm:$0xff] %vm207, 0.0
        %214 = vst.msk [vmem:[#allocation2 + $0x28] sm:$0x1] %vm210, 0.0
        %215 = vst.msk [vmem:[#allocation2 + $0x30] sm:$0xff] %vm207, 0.0
        %216 = vst.msk [vmem:[#allocation2 + $0x38] sm:$0xff] %vm207, 0.0
        %217 = vst.msk [vmem:[#allocation2 + $0x40] sm:$0x1] %vm210, 0.0
        %218 = vst.msk [vmem:[#allocation2 + $0x48] sm:$0xff] %vm207, 0.0
        %219 = vst.msk [vmem:[#allocation2 + $0x50] sm:$0xff] %vm207, 0.0
        %220 = vst.msk [vmem:[#allocation2 + $0x58] sm:$0x1] %vm210, 0.0
        %221 = vst.msk [vmem:[#allocation2 + $0x60] sm:$0xff] %vm207, 0.0
        %222 = vst.msk [vmem:[#allocation2 + $0x68] sm:$0xff] %vm207, 0.0
        %223 = vst.msk [vmem:[#allocation2 + $0x70] sm:$0x1] %vm210, 0.0
        %224 = vst.msk [vmem:[#allocation2 + $0x78] sm:$0xff] %vm207, 0.0
        %225 = vst.msk [vmem:[#allocation2 + $0x80] sm:$0xff] %vm207, 0.0
        %226 = vst.msk [vmem:[#allocation2 + $0x88] sm:$0x1] %vm210, 0.0
        %227 = vst.msk [vmem:[#allocation2 + $0x90] sm:$0xff] %vm207, 0.0
        %228 = vst.msk [vmem:[#allocation2 + $0x98] sm:$0xff] %vm207, 0.0
        %229 = vst.msk [vmem:[#allocation2 + $0xa0] sm:$0x1] %vm210, 0.0
        %230 = vst.msk [vmem:[#allocation2 + $0xa8] sm:$0xff] %vm207, 0.0
        %231 = vst.msk [vmem:[#allocation2 + $0xb0] sm:$0xff] %vm207, 0.0
        %232 = vst.msk [vmem:[#allocation2 + $0xb8] sm:$0x1] %vm210, 0.0
        %233 = vst.msk [vmem:[#allocation2 + $0xc0] sm:$0xff] %vm207, 0.0
        %234 = vst.msk [vmem:[#allocation2 + $0xc8] sm:$0xff] %vm207, 0.0
        %235 = vst.msk [vmem:[#allocation2 + $0xd0] sm:$0x1] %vm210, 0.0
        %236 = vst.msk [vmem:[#allocation2 + $0xd8] sm:$0xff] %vm207, 0.0
        %237 = vst.msk [vmem:[#allocation2 + $0xe0] sm:$0xff] %vm207, 0.0
        %238 = vst.msk [vmem:[#allocation2 + $0xe8] sm:$0x1] %vm210, 0.0
        %239 = vst.msk [vmem:[#allocation2 + $0xf0] sm:$0xff] %vm207, 0.0
        %240 = vst.msk [vmem:[#allocation2 + $0xf8] sm:$0xff] %vm207, 0.0
        %241 = vst.msk [vmem:[#allocation2 + $0x100] sm:$0x1] %vm210, 0.0
        %242 = vst.msk [vmem:[#allocation2 + $0x108] sm:$0xff] %vm207, 0.0
        %243 = vst.msk [vmem:[#allocation2 + $0x110] sm:$0xff] %vm207, 0.0
        %244 = vst.msk [vmem:[#allocation2 + $0x118] sm:$0x1] %vm210, 0.0
        %245 = vst.msk [vmem:[#allocation2 + $0x120] sm:$0xff] %vm207, 0.0
        %246 = vst.msk [vmem:[#allocation2 + $0x128] sm:$0xff] %vm207, 0.0
        %247 = vst.msk [vmem:[#allocation2 + $0x130] sm:$0x1] %vm210, 0.0
        %248 = vst.msk [vmem:[#allocation2 + $0x138] sm:$0xff] %vm207, 0.0
        %249 = vst.msk [vmem:[#allocation2 + $0x140] sm:$0xff] %vm207, 0.0
        %250 = vst.msk [vmem:[#allocation2 + $0x148] sm:$0x1] %vm210, 0.0
        %251 = vst.msk [vmem:[#allocation2 + $0x150] sm:$0xff] %vm207, 0.0
        %252 = vst.msk [vmem:[#allocation2 + $0x158] sm:$0xff] %vm207, 0.0
        %253 = vst.msk [vmem:[#allocation2 + $0x160] sm:$0x1] %vm210, 0.0
        %254 = vst.msk [vmem:[#allocation2 + $0x168] sm:$0xff] %vm207, 0.0
        %255 = vst.msk [vmem:[#allocation2 + $0x170] sm:$0xff] %vm207, 0.0
        %256 = vst.msk [vmem:[#allocation2 + $0x178] sm:$0x1] %vm210, 0.0
        %257 = vst.msk [vmem:[#allocation2 + $0x180] sm:$0xff] %vm207, 0.0
        %258 = vst.msk [vmem:[#allocation2 + $0x188] sm:$0xff] %vm207, 0.0
        %259 = vst.msk [vmem:[#allocation2 + $0x190] sm:$0x1] %vm210, 0.0
        %v260 = vld [vmem:[%s206] sm:$0xff]
        %v261 = vld [vmem:[%s206 + $0x8] sm:$0xff]
        %v262 = vld [vmem:[%s206 + $0x10] sm:$0xff]
        %v263 = vld [vmem:[%s206 + $0x18] sm:$0xff]
        %v264 = vld [vmem:[%s206 + $0x20] sm:$0xff]
        %v265 = vld [vmem:[%s206 + $0x28] sm:$0xff]
        %v266 = vld [vmem:[%s206 + $0x30] sm:$0xff]
        %v267 = vld [vmem:[%s206 + $0x38] sm:$0xff]
        %v268 = vld [vmem:[%s206 + $0x40] sm:$0xff]
        %v269 = vld [vmem:[%s206 + $0x48] sm:$0xff]
        %v270 = vld [vmem:[%s206 + $0x50] sm:$0xff]
        %v271 = vld [vmem:[%s206 + $0x58] sm:$0xff]
        %v272 = vld [vmem:[%s206 + $0x60] sm:$0xff]
        %v273 = vld [vmem:[%s206 + $0x68] sm:$0xff]
        %v274 = vld [vmem:[%s206 + $0x70] sm:$0xff]
        %v275 = vld [vmem:[%s206 + $0x78] sm:$0xff]
        %v276 = vld [vmem:[%s206 + $0x80] sm:$0xff]
        %v277 = vld [vmem:[%s206 + $0x88] sm:$0xff]
        %v278 = vld [vmem:[%s206 + $0x90] sm:$0xff]
        %v279 = vld [vmem:[%s206 + $0x98] sm:$0xff]
        %v280 = vld [vmem:[%s206 + $0xa0] sm:$0xff]
        %v281 = vld [vmem:[%s206 + $0xa8] sm:$0xff]
        %v282 = vld [vmem:[%s206 + $0xb0] sm:$0xff]
        %v283 = vld [vmem:[%s206 + $0xb8] sm:$0xff]
        %v284 = vld [vmem:[%s206 + $0xc0] sm:$0xff]
        %v285 = vld [vmem:[%s206 + $0xc8] sm:$0xff]
        %v286 = vld [vmem:[%s206 + $0xd0] sm:$0xff]
        %v287 = vld [vmem:[%s206 + $0xd8] sm:$0xff]
        %v288 = vld [vmem:[%s206 + $0xe0] sm:$0xff]
        %v289 = vld [vmem:[%s206 + $0xe8] sm:$0xff]
        %v290 = vld [vmem:[%s206 + $0xf0] sm:$0xff]
        %v291 = vld [vmem:[%s206 + $0xf8] sm:$0xff]
        %292 = vst.msk [vmem:[#allocation2] sm:$0xff] %vm207, %v260
        %293 = vst.msk [vmem:[#allocation2 + $0x8] sm:$0xff] %vm207, %v261
        %294 = vst.msk [vmem:[#allocation2 + $0x18] sm:$0xff] %vm207, %v262
        %295 = vst.msk [vmem:[#allocation2 + $0x20] sm:$0xff] %vm207, %v263
        %296 = vst.msk [vmem:[#allocation2 + $0x30] sm:$0xff] %vm207, %v264
        %297 = vst.msk [vmem:[#allocation2 + $0x38] sm:$0xff] %vm207, %v265
        %298 = vst.msk [vmem:[#allocation2 + $0x48] sm:$0xff] %vm207, %v266
        %299 = vst.msk [vmem:[#allocation2 + $0x50] sm:$0xff] %vm207, %v267
        %300 = vst.msk [vmem:[#allocation2 + $0x60] sm:$0xff] %vm207, %v268
        %301 = vst.msk [vmem:[#allocation2 + $0x68] sm:$0xff] %vm207, %v269
        %302 = vst.msk [vmem:[#allocation2 + $0x78] sm:$0xff] %vm207, %v270
        %303 = vst.msk [vmem:[#allocation2 + $0x80] sm:$0xff] %vm207, %v271
        %304 = vst.msk [vmem:[#allocation2 + $0x90] sm:$0xff] %vm207, %v272
        %305 = vst.msk [vmem:[#allocation2 + $0x98] sm:$0xff] %vm207, %v273
        %306 = vst.msk [vmem:[#allocation2 + $0xa8] sm:$0xff] %vm207, %v274
        %307 = vst.msk [vmem:[#allocation2 + $0xb0] sm:$0xff] %vm207, %v275
        %308 = vst.msk [vmem:[#allocation2 + $0xc0] sm:$0xff] %vm207, %v276
        %309 = vst.msk [vmem:[#allocation2 + $0xc8] sm:$0xff] %vm207, %v277
        %310 = vst.msk [vmem:[#allocation2 + $0xd8] sm:$0xff] %vm207, %v278
        %311 = vst.msk [vmem:[#allocation2 + $0xe0] sm:$0xff] %vm207, %v279
        %312 = vst.msk [vmem:[#allocation2 + $0xf0] sm:$0xff] %vm207, %v280
        %313 = vst.msk [vmem:[#allocation2 + $0xf8] sm:$0xff] %vm207, %v281
        %314 = vst.msk [vmem:[#allocation2 + $0x108] sm:$0xff] %vm207, %v282
        %315 = vst.msk [vmem:[#allocation2 + $0x110] sm:$0xff] %vm207, %v283
        %316 = vst.msk [vmem:[#allocation2 + $0x120] sm:$0xff] %vm207, %v284
        %317 = vst.msk [vmem:[#allocation2 + $0x128] sm:$0xff] %vm207, %v285
        %318 = vst.msk [vmem:[#allocation2 + $0x138] sm:$0xff] %vm207, %v286
        %319 = vst.msk [vmem:[#allocation2 + $0x140] sm:$0xff] %vm207, %v287
        %320 = vst.msk [vmem:[#allocation2 + $0x150] sm:$0xff] %vm207, %v288
        %321 = vst.msk [vmem:[#allocation2 + $0x158] sm:$0xff] %vm207, %v289
        %322 = vst.msk [vmem:[#allocation2 + $0x168] sm:$0xff] %vm207, %v290
        %323 = vst.msk [vmem:[#allocation2 + $0x170] sm:$0xff] %vm207, %v291
        %v324 = vld [vmem:[#allocation2] sm:$0xff]
        %v325 = vld [vmem:[#allocation2 + $0x8] sm:$0xff]
        %v326 = vld [vmem:[#allocation2 + $0x18] sm:$0xff]
        %v327 = vld [vmem:[#allocation2 + $0x20] sm:$0xff]
        %v328 = vld [vmem:[#allocation2 + $0x30] sm:$0xff]
        %v329 = vld [vmem:[#allocation2 + $0x38] sm:$0xff]
        %v330 = vld [vmem:[#allocation2 + $0x48] sm:$0xff]
        %v331 = vld [vmem:[#allocation2 + $0x50] sm:$0xff]
        %v332 = vld [vmem:[#allocation2 + $0x60] sm:$0xff]
        %v333 = vld [vmem:[#allocation2 + $0x68] sm:$0xff]
        %v334 = vld [vmem:[#allocation2 + $0x78] sm:$0xff]
        %v335 = vld [vmem:[#allocation2 + $0x80] sm:$0xff]
        %v336 = vld [vmem:[#allocation2 + $0x90] sm:$0xff]
        %v337 = vld [vmem:[#allocation2 + $0x98] sm:$0xff]
        %v338 = vld [vmem:[#allocation2 + $0xa8] sm:$0xff]
        %v339 = vld [vmem:[#allocation2 + $0xb0] sm:$0xff]
        %v340 = vld [vmem:[#allocation2 + $0xc0] sm:$0xff]
        %v341 = vld [vmem:[#allocation2 + $0xc8] sm:$0xff]
        %v342 = vld [vmem:[#allocation2 + $0xd8] sm:$0xff]
        %v343 = vld [vmem:[#allocation2 + $0xe0] sm:$0xff]
        %v344 = vld [vmem:[#allocation2 + $0xf0] sm:$0xff]
        %v345 = vld [vmem:[#allocation2 + $0xf8] sm:$0xff]
        %v346 = vld [vmem:[#allocation2 + $0x108] sm:$0xff]
        %v347 = vld [vmem:[#allocation2 + $0x110] sm:$0xff]
        %v348 = vld [vmem:[#allocation2 + $0x120] sm:$0xff]
        %v349 = vld [vmem:[#allocation2 + $0x128] sm:$0xff]
        %v350 = vld [vmem:[#allocation2 + $0x138] sm:$0xff]
        %v351 = vld [vmem:[#allocation2 + $0x140] sm:$0xff]
        %v352 = vld [vmem:[#allocation2 + $0x150] sm:$0xff]
        %v353 = vld [vmem:[#allocation2 + $0x158] sm:$0xff]
        %v354 = vld [vmem:[#allocation2 + $0x168] sm:$0xff]
        %v355 = vld [vmem:[#allocation2 + $0x170] sm:$0xff]
        %v356 = vld [vmem:[#allocation2 + $0x1] sm:$0xff]
        %v357 = vld [vmem:[#allocation2 + $0x9] sm:$0xff]
        %v358 = vld [vmem:[#allocation2 + $0x19] sm:$0xff]
        %v359 = vld [vmem:[#allocation2 + $0x21] sm:$0xff]
        %v360 = vld [vmem:[#allocation2 + $0x31] sm:$0xff]
        %v361 = vld [vmem:[#allocation2 + $0x39] sm:$0xff]
        %v362 = vld [vmem:[#allocation2 + $0x49] sm:$0xff]
        %v363 = vld [vmem:[#allocation2 + $0x51] sm:$0xff]
        %v364 = vld [vmem:[#allocation2 + $0x61] sm:$0xff]
        %v365 = vld [vmem:[#allocation2 + $0x69] sm:$0xff]
        %v366 = vld [vmem:[#allocation2 + $0x79] sm:$0xff]
        %v367 = vld [vmem:[#allocation2 + $0x81] sm:$0xff]
        %v368 = vld [vmem:[#allocation2 + $0x91] sm:$0xff]
        %v369 = vld [vmem:[#allocation2 + $0x99] sm:$0xff]
        %v370 = vld [vmem:[#allocation2 + $0xa9] sm:$0xff]
        %v371 = vld [vmem:[#allocation2 + $0xb1] sm:$0xff]
        %v372 = vld [vmem:[#allocation2 + $0xc1] sm:$0xff]
        %v373 = vld [vmem:[#allocation2 + $0xc9] sm:$0xff]
        %v374 = vld [vmem:[#allocation2 + $0xd9] sm:$0xff]
        %v375 = vld [vmem:[#allocation2 + $0xe1] sm:$0xff]
        %v376 = vld [vmem:[#allocation2 + $0xf1] sm:$0xff]
        %v377 = vld [vmem:[#allocation2 + $0xf9] sm:$0xff]
        %v378 = vld [vmem:[#allocation2 + $0x109] sm:$0xff]
        %v379 = vld [vmem:[#allocation2 + $0x111] sm:$0xff]
        %v380 = vld [vmem:[#allocation2 + $0x121] sm:$0xff]
        %v381 = vld [vmem:[#allocation2 + $0x129] sm:$0xff]
        %v382 = vld [vmem:[#allocation2 + $0x139] sm:$0xff]
        %v383 = vld [vmem:[#allocation2 + $0x141] sm:$0xff]
        %v384 = vld [vmem:[#allocation2 + $0x151] sm:$0xff]
        %v385 = vld [vmem:[#allocation2 + $0x159] sm:$0xff]
        %v386 = vld [vmem:[#allocation2 + $0x169] sm:$0xff]
        %v387 = vld [vmem:[#allocation2 + $0x171] sm:$0xff]
        %s388 = scalar_lea.vmem [#allocation2], 24
        %v389 = vld [vmem:[%s388] sm:$0xff]
        %v390 = vld [vmem:[%s388 + $0x8] sm:$0xff]
        %v391 = vld [vmem:[%s388 + $0x18] sm:$0xff]
        %v392 = vld [vmem:[%s388 + $0x20] sm:$0xff]
        %v393 = vld [vmem:[%s388 + $0x30] sm:$0xff]
        %v394 = vld [vmem:[%s388 + $0x38] sm:$0xff]
        %v395 = vld [vmem:[%s388 + $0x48] sm:$0xff]
        %v396 = vld [vmem:[%s388 + $0x50] sm:$0xff]
        %v397 = vld [vmem:[%s388 + $0x60] sm:$0xff]
        %v398 = vld [vmem:[%s388 + $0x68] sm:$0xff]
        %v399 = vld [vmem:[%s388 + $0x78] sm:$0xff]
        %v400 = vld [vmem:[%s388 + $0x80] sm:$0xff]
        %v401 = vld [vmem:[%s388 + $0x90] sm:$0xff]
        %v402 = vld [vmem:[%s388 + $0x98] sm:$0xff]
        %v403 = vld [vmem:[%s388 + $0xa8] sm:$0xff]
        %v404 = vld [vmem:[%s388 + $0xb0] sm:$0xff]
        %v405 = vld [vmem:[%s388 + $0xc0] sm:$0xff]
        %v406 = vld [vmem:[%s388 + $0xc8] sm:$0xff]
        %v407 = vld [vmem:[%s388 + $0xd8] sm:$0xff]
        %v408 = vld [vmem:[%s388 + $0xe0] sm:$0xff]
        %v409 = vld [vmem:[%s388 + $0xf0] sm:$0xff]
        %v410 = vld [vmem:[%s388 + $0xf8] sm:$0xff]
        %v411 = vld [vmem:[%s388 + $0x108] sm:$0xff]
        %v412 = vld [vmem:[%s388 + $0x110] sm:$0xff]
        %v413 = vld [vmem:[%s388 + $0x120] sm:$0xff]
        %v414 = vld [vmem:[%s388 + $0x128] sm:$0xff]
        %v415 = vld [vmem:[%s388 + $0x138] sm:$0xff]
        %v416 = vld [vmem:[%s388 + $0x140] sm:$0xff]
        %v417 = vld [vmem:[%s388 + $0x150] sm:$0xff]
        %v418 = vld [vmem:[%s388 + $0x158] sm:$0xff]
        %v419 = vld [vmem:[%s388 + $0x168] sm:$0xff]
        %v420 = vld [vmem:[%s388 + $0x170] sm:$0xff]
        %v421 = vld [vmem:[%s388 + $0x1] sm:$0xff]
        %v422 = vld [vmem:[%s388 + $0x9] sm:$0xff]
        %v423 = vld [vmem:[%s388 + $0x19] sm:$0xff]
        %v424 = vld [vmem:[%s388 + $0x21] sm:$0xff]
        %v425 = vld [vmem:[%s388 + $0x31] sm:$0xff]
        %v426 = vld [vmem:[%s388 + $0x39] sm:$0xff]
        %v427 = vld [vmem:[%s388 + $0x49] sm:$0xff]
        %v428 = vld [vmem:[%s388 + $0x51] sm:$0xff]
        %v429 = vld [vmem:[%s388 + $0x61] sm:$0xff]
        %v430 = vld [vmem:[%s388 + $0x69] sm:$0xff]
        %v431 = vld [vmem:[%s388 + $0x79] sm:$0xff]
        %v432 = vld [vmem:[%s388 + $0x81] sm:$0xff]
        %v433 = vld [vmem:[%s388 + $0x91] sm:$0xff]
        %v434 = vld [vmem:[%s388 + $0x99] sm:$0xff]
        %v435 = vld [vmem:[%s388 + $0xa9] sm:$0xff]
        %v436 = vld [vmem:[%s388 + $0xb1] sm:$0xff]
        %v437 = vld [vmem:[%s388 + $0xc1] sm:$0xff]
        %v438 = vld [vmem:[%s388 + $0xc9] sm:$0xff]
        %v439 = vld [vmem:[%s388 + $0xd9] sm:$0xff]
        %v440 = vld [vmem:[%s388 + $0xe1] sm:$0xff]
        %v441 = vld [vmem:[%s388 + $0xf1] sm:$0xff]
        %v442 = vld [vmem:[%s388 + $0xf9] sm:$0xff]
        %v443 = vld [vmem:[%s388 + $0x109] sm:$0xff]
        %v444 = vld [vmem:[%s388 + $0x111] sm:$0xff]
        %v445 = vld [vmem:[%s388 + $0x121] sm:$0xff]
        %v446 = vld [vmem:[%s388 + $0x129] sm:$0xff]
        %v447 = vld [vmem:[%s388 + $0x139] sm:$0xff]
        %v448 = vld [vmem:[%s388 + $0x141] sm:$0xff]
        %v449 = vld [vmem:[%s388 + $0x151] sm:$0xff]
        %v450 = vld [vmem:[%s388 + $0x159] sm:$0xff]
        %v451 = vld [vmem:[%s388 + $0x169] sm:$0xff]
        %v452 = vld [vmem:[%s388 + $0x171] sm:$0xff]
        %485 = vrot.lane.b32.xlu0 %v356, 4
        %v486 = vpop.permute.xlu0 %485
        %487 = vrot.lane.b32.xlu0 %v357, 4
        %v488 = vpop.permute.xlu0 %487
        %489 = vrot.lane.b32.xlu0 %v358, 4
        %v490 = vpop.permute.xlu0 %489
        %491 = vrot.lane.b32.xlu0 %v359, 4
        %v492 = vpop.permute.xlu0 %491
        %493 = vrot.lane.b32.xlu0 %v360, 4
        %v494 = vpop.permute.xlu0 %493
        %495 = vrot.lane.b32.xlu0 %v361, 4
        %v496 = vpop.permute.xlu0 %495
        %497 = vrot.lane.b32.xlu0 %v362, 4
        %v498 = vpop.permute.xlu0 %497
        %499 = vrot.lane.b32.xlu0 %v363, 4
        %v500 = vpop.permute.xlu0 %499
        %501 = vrot.lane.b32.xlu0 %v364, 4
        %v502 = vpop.permute.xlu0 %501
        %503 = vrot.lane.b32.xlu0 %v365, 4
        %v504 = vpop.permute.xlu0 %503
        %505 = vrot.lane.b32.xlu0 %v366, 4
        %v506 = vpop.permute.xlu0 %505
        %507 = vrot.lane.b32.xlu0 %v367, 4
        %v508 = vpop.permute.xlu0 %507
        %509 = vrot.lane.b32.xlu0 %v368, 4
        %v510 = vpop.permute.xlu0 %509
        %511 = vrot.lane.b32.xlu0 %v369, 4
        %v512 = vpop.permute.xlu0 %511
        %513 = vrot.lane.b32.xlu0 %v370, 4
        %v514 = vpop.permute.xlu0 %513
        %515 = vrot.lane.b32.xlu0 %v371, 4
        %v516 = vpop.permute.xlu0 %515
        %517 = vrot.lane.b32.xlu0 %v372, 4
        %v518 = vpop.permute.xlu0 %517
        %519 = vrot.lane.b32.xlu0 %v373, 4
        %v520 = vpop.permute.xlu0 %519
        %521 = vrot.lane.b32.xlu0 %v374, 4
        %v522 = vpop.permute.xlu0 %521
        %523 = vrot.lane.b32.xlu0 %v375, 4
        %v524 = vpop.permute.xlu0 %523
        %525 = vrot.lane.b32.xlu0 %v376, 4
        %v526 = vpop.permute.xlu0 %525
        %527 = vrot.lane.b32.xlu0 %v377, 4
        %v528 = vpop.permute.xlu0 %527
        %529 = vrot.lane.b32.xlu0 %v378, 4
        %v530 = vpop.permute.xlu0 %529
        %531 = vrot.lane.b32.xlu0 %v379, 4
        %v532 = vpop.permute.xlu0 %531
        %533 = vrot.lane.b32.xlu0 %v380, 4
        %v534 = vpop.permute.xlu0 %533
        %535 = vrot.lane.b32.xlu0 %v381, 4
        %v536 = vpop.permute.xlu0 %535
        %537 = vrot.lane.b32.xlu0 %v382, 4
        %v538 = vpop.permute.xlu0 %537
        %539 = vrot.lane.b32.xlu0 %v383, 4
        %v540 = vpop.permute.xlu0 %539
        %541 = vrot.lane.b32.xlu0 %v384, 4
        %v542 = vpop.permute.xlu0 %541
        %543 = vrot.lane.b32.xlu0 %v385, 4
        %v544 = vpop.permute.xlu0 %543
        %545 = vrot.lane.b32.xlu0 %v386, 4
        %v546 = vpop.permute.xlu0 %545
        %547 = vrot.lane.b32.xlu0 %v387, 4
        %v548 = vpop.permute.xlu0 %547
        %613 = vrot.lane.b32.xlu0 %v389, 8
        %v614 = vpop.permute.xlu0 %613
        %615 = vrot.lane.b32.xlu0 %v390, 8
        %v616 = vpop.permute.xlu0 %615
        %617 = vrot.lane.b32.xlu0 %v391, 8
        %v618 = vpop.permute.xlu0 %617
        %619 = vrot.lane.b32.xlu0 %v392, 8
        %v620 = vpop.permute.xlu0 %619
        %621 = vrot.lane.b32.xlu0 %v393, 8
        %v622 = vpop.permute.xlu0 %621
        %623 = vrot.lane.b32.xlu0 %v394, 8
        %v624 = vpop.permute.xlu0 %623
        %625 = vrot.lane.b32.xlu0 %v395, 8
        %v626 = vpop.permute.xlu0 %625
        %627 = vrot.lane.b32.xlu0 %v396, 8
        %v628 = vpop.permute.xlu0 %627
        %629 = vrot.lane.b32.xlu0 %v397, 8
        %v630 = vpop.permute.xlu0 %629
        %631 = vrot.lane.b32.xlu0 %v398, 8
        %v632 = vpop.permute.xlu0 %631
        %633 = vrot.lane.b32.xlu0 %v399, 8
        %v634 = vpop.permute.xlu0 %633
        %635 = vrot.lane.b32.xlu0 %v400, 8
        %v636 = vpop.permute.xlu0 %635
        %637 = vrot.lane.b32.xlu0 %v401, 8
        %v638 = vpop.permute.xlu0 %637
        %639 = vrot.lane.b32.xlu0 %v402, 8
        %v640 = vpop.permute.xlu0 %639
        %641 = vrot.lane.b32.xlu0 %v403, 8
        %v642 = vpop.permute.xlu0 %641
        %643 = vrot.lane.b32.xlu0 %v404, 8
        %v644 = vpop.permute.xlu0 %643
        %645 = vrot.lane.b32.xlu0 %v405, 8
        %v646 = vpop.permute.xlu0 %645
        %647 = vrot.lane.b32.xlu0 %v406, 8
        %v648 = vpop.permute.xlu0 %647
        %649 = vrot.lane.b32.xlu0 %v407, 8
        %v650 = vpop.permute.xlu0 %649
        %651 = vrot.lane.b32.xlu0 %v408, 8
        %v652 = vpop.permute.xlu0 %651
        %653 = vrot.lane.b32.xlu0 %v409, 8
        %v654 = vpop.permute.xlu0 %653
        %655 = vrot.lane.b32.xlu0 %v410, 8
        %v656 = vpop.permute.xlu0 %655
        %657 = vrot.lane.b32.xlu0 %v411, 8
        %v658 = vpop.permute.xlu0 %657
        %659 = vrot.lane.b32.xlu0 %v412, 8
        %v660 = vpop.permute.xlu0 %659
        %661 = vrot.lane.b32.xlu0 %v413, 8
        %v662 = vpop.permute.xlu0 %661
        %663 = vrot.lane.b32.xlu0 %v414, 8
        %v664 = vpop.permute.xlu0 %663
        %665 = vrot.lane.b32.xlu0 %v415, 8
        %v666 = vpop.permute.xlu0 %665
        %667 = vrot.lane.b32.xlu0 %v416, 8
        %v668 = vpop.permute.xlu0 %667
        %669 = vrot.lane.b32.xlu0 %v417, 8
        %v670 = vpop.permute.xlu0 %669
        %671 = vrot.lane.b32.xlu0 %v418, 8
        %v672 = vpop.permute.xlu0 %671
        %673 = vrot.lane.b32.xlu0 %v419, 8
        %v674 = vpop.permute.xlu0 %673
        %675 = vrot.lane.b32.xlu0 %v420, 8
        %v676 = vpop.permute.xlu0 %675
        %741 = vrot.lane.b32.xlu0 %v421, 12
        %v742 = vpop.permute.xlu0 %741
        %743 = vrot.lane.b32.xlu0 %v422, 12
        %v744 = vpop.permute.xlu0 %743
        %745 = vrot.lane.b32.xlu0 %v423, 12
        %v746 = vpop.permute.xlu0 %745
        %747 = vrot.lane.b32.xlu0 %v424, 12
        %v748 = vpop.permute.xlu0 %747
        %749 = vrot.lane.b32.xlu0 %v425, 12
        %v750 = vpop.permute.xlu0 %749
        %751 = vrot.lane.b32.xlu0 %v426, 12
        %v752 = vpop.permute.xlu0 %751
        %753 = vrot.lane.b32.xlu0 %v427, 12
        %v754 = vpop.permute.xlu0 %753
        %755 = vrot.lane.b32.xlu0 %v428, 12
        %v756 = vpop.permute.xlu0 %755
        %757 = vrot.lane.b32.xlu0 %v429, 12
        %v758 = vpop.permute.xlu0 %757
        %759 = vrot.lane.b32.xlu0 %v430, 12
        %v760 = vpop.permute.xlu0 %759
        %761 = vrot.lane.b32.xlu0 %v431, 12
        %v762 = vpop.permute.xlu0 %761
        %763 = vrot.lane.b32.xlu0 %v432, 12
        %v764 = vpop.permute.xlu0 %763
        %765 = vrot.lane.b32.xlu0 %v433, 12
        %v766 = vpop.permute.xlu0 %765
        %767 = vrot.lane.b32.xlu0 %v434, 12
        %v768 = vpop.permute.xlu0 %767
        %769 = vrot.lane.b32.xlu0 %v435, 12
        %v770 = vpop.permute.xlu0 %769
        %771 = vrot.lane.b32.xlu0 %v436, 12
        %v772 = vpop.permute.xlu0 %771
        %773 = vrot.lane.b32.xlu0 %v437, 12
        %v774 = vpop.permute.xlu0 %773
        %775 = vrot.lane.b32.xlu0 %v438, 12
        %v776 = vpop.permute.xlu0 %775
        %777 = vrot.lane.b32.xlu0 %v439, 12
        %v778 = vpop.permute.xlu0 %777
        %779 = vrot.lane.b32.xlu0 %v440, 12
        %v780 = vpop.permute.xlu0 %779
        %781 = vrot.lane.b32.xlu0 %v441, 12
        %v782 = vpop.permute.xlu0 %781
        %783 = vrot.lane.b32.xlu0 %v442, 12
        %v784 = vpop.permute.xlu0 %783
        %785 = vrot.lane.b32.xlu0 %v443, 12
        %v786 = vpop.permute.xlu0 %785
        %787 = vrot.lane.b32.xlu0 %v444, 12
        %v788 = vpop.permute.xlu0 %787
        %789 = vrot.lane.b32.xlu0 %v445, 12
        %v790 = vpop.permute.xlu0 %789
        %791 = vrot.lane.b32.xlu0 %v446, 12
        %v792 = vpop.permute.xlu0 %791
        %793 = vrot.lane.b32.xlu0 %v447, 12
        %v794 = vpop.permute.xlu0 %793
        %795 = vrot.lane.b32.xlu0 %v448, 12
        %v796 = vpop.permute.xlu0 %795
        %797 = vrot.lane.b32.xlu0 %v449, 12
        %v798 = vpop.permute.xlu0 %797
        %799 = vrot.lane.b32.xlu0 %v450, 12
        %v800 = vpop.permute.xlu0 %799
        %801 = vrot.lane.b32.xlu0 %v451, 12
        %v802 = vpop.permute.xlu0 %801
        %803 = vrot.lane.b32.xlu0 %v452, 12
        %v804 = vpop.permute.xlu0 %803
        %v837 = vsel %vm207, %v324, %v486
        %v838 = vsel %vm207, %v325, %v488
        %v839 = vsel %vm207, %v326, %v490
        %v840 = vsel %vm207, %v327, %v492
        %v841 = vsel %vm207, %v328, %v494
        %v842 = vsel %vm207, %v329, %v496
        %v843 = vsel %vm207, %v330, %v498
        %v844 = vsel %vm207, %v331, %v500
        %v845 = vsel %vm207, %v332, %v502
        %v846 = vsel %vm207, %v333, %v504
        %v847 = vsel %vm207, %v334, %v506
        %v848 = vsel %vm207, %v335, %v508
        %v849 = vsel %vm207, %v336, %v510
        %v850 = vsel %vm207, %v337, %v512
        %v851 = vsel %vm207, %v338, %v514
        %v852 = vsel %vm207, %v339, %v516
        %v853 = vsel %vm207, %v340, %v518
        %v854 = vsel %vm207, %v341, %v520
        %v855 = vsel %vm207, %v342, %v522
        %v856 = vsel %vm207, %v343, %v524
        %v857 = vsel %vm207, %v344, %v526
        %v858 = vsel %vm207, %v345, %v528
        %v859 = vsel %vm207, %v346, %v530
        %v860 = vsel %vm207, %v347, %v532
        %v861 = vsel %vm207, %v348, %v534
        %v862 = vsel %vm207, %v349, %v536
        %v863 = vsel %vm207, %v350, %v538
        %v864 = vsel %vm207, %v351, %v540
        %v865 = vsel %vm207, %v352, %v542
        %v866 = vsel %vm207, %v353, %v544
        %v867 = vsel %vm207, %v354, %v546
        %v868 = vsel %vm207, %v355, %v548
        %vm869 = vcmask 64512
        %v870 = vsel %vm869, %v837, %v614
        %v871 = vsel %vm869, %v838, %v616
        %v872 = vsel %vm869, %v839, %v618
        %v873 = vsel %vm869, %v840, %v620
        %v874 = vsel %vm869, %v841, %v622
        %v875 = vsel %vm869, %v842, %v624
        %v876 = vsel %vm869, %v843, %v626
        %v877 = vsel %vm869, %v844, %v628
        %v878 = vsel %vm869, %v845, %v630
        %v879 = vsel %vm869, %v846, %v632
        %v880 = vsel %vm869, %v847, %v634
        %v881 = vsel %vm869, %v848, %v636
        %v882 = vsel %vm869, %v849, %v638
        %v883 = vsel %vm869, %v850, %v640
        %v884 = vsel %vm869, %v851, %v642
        %v885 = vsel %vm869, %v852, %v644
        %v886 = vsel %vm869, %v853, %v646
        %v887 = vsel %vm869, %v854, %v648
        %v888 = vsel %vm869, %v855, %v650
        %v889 = vsel %vm869, %v856, %v652
        %v890 = vsel %vm869, %v857, %v654
        %v891 = vsel %vm869, %v858, %v656
        %v892 = vsel %vm869, %v859, %v658
        %v893 = vsel %vm869, %v860, %v660
        %v894 = vsel %vm869, %v861, %v662
        %v895 = vsel %vm869, %v862, %v664
        %v896 = vsel %vm869, %v863, %v666
        %v897 = vsel %vm869, %v864, %v668
        %v898 = vsel %vm869, %v865, %v670
        %v899 = vsel %vm869, %v866, %v672
        %v900 = vsel %vm869, %v867, %v674
        %v901 = vsel %vm869, %v868, %v676
        %vm902 = vcmask 97280
        %v903 = vsel %vm902, %v870, %v742
        %v904 = vsel %vm902, %v871, %v744
        %v905 = vsel %vm902, %v872, %v746
        %v906 = vsel %vm902, %v873, %v748
        %v907 = vsel %vm902, %v874, %v750
        %v908 = vsel %vm902, %v875, %v752
        %v909 = vsel %vm902, %v876, %v754
        %v910 = vsel %vm902, %v877, %v756
        %v911 = vsel %vm902, %v878, %v758
        %v912 = vsel %vm902, %v879, %v760
        %v913 = vsel %vm902, %v880, %v762
        %v914 = vsel %vm902, %v881, %v764
        %v915 = vsel %vm902, %v882, %v766
        %v916 = vsel %vm902, %v883, %v768
        %v917 = vsel %vm902, %v884, %v770
        %v918 = vsel %vm902, %v885, %v772
        %v919 = vsel %vm902, %v886, %v774
        %v920 = vsel %vm902, %v887, %v776
        %v921 = vsel %vm902, %v888, %v778
        %v922 = vsel %vm902, %v889, %v780
        %v923 = vsel %vm902, %v890, %v782
        %v924 = vsel %vm902, %v891, %v784
        %v925 = vsel %vm902, %v892, %v786
        %v926 = vsel %vm902, %v893, %v788
        %v927 = vsel %vm902, %v894, %v790
        %v928 = vsel %vm902, %v895, %v792
        %v929 = vsel %vm902, %v896, %v794
        %v930 = vsel %vm902, %v897, %v796
        %v931 = vsel %vm902, %v898, %v798
        %v932 = vsel %vm902, %v899, %v800
        %v933 = vsel %vm902, %v900, %v802
        %v934 = vsel %vm902, %v901, %v804
        %v935 = vld [vmem:[%s1] sm:$0xff]
        %v936 = vld [vmem:[%s1 + $0x8] sm:$0xff]
        %v937 = vld [vmem:[%s2] sm:$0x1]
        %v939 = vperm.slane %v937, 0
        %vm941 = vcmask 130048
        %v943 = vsel %vm941, %v903, 0
        %v946 = vsel %vm941, %v904, 0
        %v949 = vsel %vm941, %v905, 0
        %v952 = vsel %vm941, %v906, 0
        %v955 = vsel %vm941, %v907, 0
        %v958 = vsel %vm941, %v908, 0
        %v961 = vsel %vm941, %v909, 0
        %v964 = vsel %vm941, %v910, 0
        %v967 = vsel %vm941, %v911, 0
        %v970 = vsel %vm941, %v912, 0
        %v973 = vsel %vm941, %v913, 0
        %v976 = vsel %vm941, %v914, 0
        %v979 = vsel %vm941, %v915, 0
        %v982 = vsel %vm941, %v916, 0
        %v985 = vsel %vm941, %v917, 0
        %v988 = vsel %vm941, %v918, 0
        %v991 = vsel %vm941, %v919, 0
        %v994 = vsel %vm941, %v920, 0
        %v997 = vsel %vm941, %v921, 0
        %v1000 = vsel %vm941, %v922, 0
        %v1003 = vsel %vm941, %v923, 0
        %v1006 = vsel %vm941, %v924, 0
        %v1009 = vsel %vm941, %v925, 0
        %v1012 = vsel %vm941, %v926, 0
        %v1015 = vsel %vm941, %v927, 0
        %v1018 = vsel %vm941, %v928, 0
        %v1021 = vsel %vm941, %v929, 0
        %v1024 = vsel %vm941, %v930, 0
        %v1027 = vsel %vm941, %v931, 0
        %v1030 = vsel %vm941, %v932, 0
        %v1033 = vsel %vm941, %v933, 0
        %v1036 = vsel %vm941, %v934, 0
        %1038 = vmatpush.msra.mxu0 0.0
        %1039 = vmatpush.msra.mxu0 0.0
        %1040 = vmatpush.msra.mxu0 0.0
        %1041 = vmatpush.msra.mxu0 0.0
        %1042 = vmatpush.msra.mxu0 0.0
        %1043 = vmatpush.msra.mxu0 0.0
        %1044 = vmatpush.msra.mxu0 0.0
        %1045 = vmatpush.msra.mxu0 0.0
        %1046 = vmatpush.msra.mxu0 0.0
        %1047 = vmatpush.msra.mxu0 0.0
        %1048 = vmatpush.msra.mxu0 0.0
        %1049 = vmatpush.msra.mxu0 0.0
        %1050 = vmatpush.msra.mxu0 0.0
        %1051 = vmatpush.msra.mxu0 0.0
        %1052 = vmatpush.msra.mxu0 %v936
        %1053 = vmatpush.msra.mxu0 %v935
        %1054 = vmatmul.f32.gmra.mxu0 %v943
        %v1055 = vpop.f32.mrf.mxu0
        %v1056 = vadd.f32 %v939, %v1055
        %1057 = vmatmul.f32.gmra.mxu0 %v946
        %v1058 = vpop.f32.mrf.mxu0
        %v1059 = vadd.f32 %v939, %v1058
        %1060 = vmatmul.f32.gmra.mxu0 %v949
        %v1061 = vpop.f32.mrf.mxu0
        %v1062 = vadd.f32 %v939, %v1061
        %1063 = vmatmul.f32.gmra.mxu0 %v952
        %v1064 = vpop.f32.mrf.mxu0
        %v1065 = vadd.f32 %v939, %v1064
        %1066 = vmatmul.f32.gmra.mxu0 %v955
        %v1067 = vpop.f32.mrf.mxu0
        %v1068 = vadd.f32 %v939, %v1067
        %1069 = vmatmul.f32.gmra.mxu0 %v958
        %v1070 = vpop.f32.mrf.mxu0
        %v1071 = vadd.f32 %v939, %v1070
        %1072 = vmatmul.f32.gmra.mxu0 %v961
        %v1073 = vpop.f32.mrf.mxu0
        %v1074 = vadd.f32 %v939, %v1073
        %1075 = vmatmul.f32.gmra.mxu0 %v964
        %v1076 = vpop.f32.mrf.mxu0
        %v1077 = vadd.f32 %v939, %v1076
        %1078 = vmatmul.f32.gmra.mxu0 %v967
        %v1079 = vpop.f32.mrf.mxu0
        %v1080 = vadd.f32 %v939, %v1079
        %1081 = vmatmul.f32.gmra.mxu0 %v970
        %v1082 = vpop.f32.mrf.mxu0
        %v1083 = vadd.f32 %v939, %v1082
        %1084 = vmatmul.f32.gmra.mxu0 %v973
        %v1085 = vpop.f32.mrf.mxu0
        %v1086 = vadd.f32 %v939, %v1085
        %1087 = vmatmul.f32.gmra.mxu0 %v976
        %v1088 = vpop.f32.mrf.mxu0
        %v1089 = vadd.f32 %v939, %v1088
        %1090 = vmatmul.f32.gmra.mxu0 %v979
        %v1091 = vpop.f32.mrf.mxu0
        %v1092 = vadd.f32 %v939, %v1091
        %1093 = vmatmul.f32.gmra.mxu0 %v982
        %v1094 = vpop.f32.mrf.mxu0
        %v1095 = vadd.f32 %v939, %v1094
        %1096 = vmatmul.f32.gmra.mxu0 %v985
        %v1097 = vpop.f32.mrf.mxu0
        %v1098 = vadd.f32 %v939, %v1097
        %1099 = vmatmul.f32.gmra.mxu0 %v988
        %v1100 = vpop.f32.mrf.mxu0
        %v1101 = vadd.f32 %v939, %v1100
        %1102 = vmatmul.f32.gmra.mxu0 %v991
        %v1103 = vpop.f32.mrf.mxu0
        %v1104 = vadd.f32 %v939, %v1103
        %1105 = vmatmul.f32.gmra.mxu0 %v994
        %v1106 = vpop.f32.mrf.mxu0
        %v1107 = vadd.f32 %v939, %v1106
        %1108 = vmatmul.f32.gmra.mxu0 %v997
        %v1109 = vpop.f32.mrf.mxu0
        %v1110 = vadd.f32 %v939, %v1109
        %1111 = vmatmul.f32.gmra.mxu0 %v1000
        %v1112 = vpop.f32.mrf.mxu0
        %v1113 = vadd.f32 %v939, %v1112
        %1114 = vmatmul.f32.gmra.mxu0 %v1003
        %v1115 = vpop.f32.mrf.mxu0
        %v1116 = vadd.f32 %v939, %v1115
        %1117 = vmatmul.f32.gmra.mxu0 %v1006
        %v1118 = vpop.f32.mrf.mxu0
        %v1119 = vadd.f32 %v939, %v1118
        %1120 = vmatmul.f32.gmra.mxu0 %v1009
        %v1121 = vpop.f32.mrf.mxu0
        %v1122 = vadd.f32 %v939, %v1121
        %1123 = vmatmul.f32.gmra.mxu0 %v1012
        %v1124 = vpop.f32.mrf.mxu0
        %v1125 = vadd.f32 %v939, %v1124
        %1126 = vmatmul.f32.gmra.mxu0 %v1015
        %v1127 = vpop.f32.mrf.mxu0
        %v1128 = vadd.f32 %v939, %v1127
        %1129 = vmatmul.f32.gmra.mxu0 %v1018
        %v1130 = vpop.f32.mrf.mxu0
        %v1131 = vadd.f32 %v939, %v1130
        %1132 = vmatmul.f32.gmra.mxu0 %v1021
        %v1133 = vpop.f32.mrf.mxu0
        %v1134 = vadd.f32 %v939, %v1133
        %1135 = vmatmul.f32.gmra.mxu0 %v1024
        %v1136 = vpop.f32.mrf.mxu0
        %v1137 = vadd.f32 %v939, %v1136
        %1138 = vmatmul.f32.gmra.mxu0 %v1027
        %v1139 = vpop.f32.mrf.mxu0
        %v1140 = vadd.f32 %v939, %v1139
        %1141 = vmatmul.f32.gmra.mxu0 %v1030
        %v1142 = vpop.f32.mrf.mxu0
        %v1143 = vadd.f32 %v939, %v1142
        %1144 = vmatmul.f32.gmra.mxu0 %v1033
        %v1145 = vpop.f32.mrf.mxu0
        %v1146 = vadd.f32 %v939, %v1145
        %1147 = vmatmul.f32.gmra.mxu0 %v1036
        %v1148 = vpop.f32.mrf.mxu0
        %v1149 = vadd.f32 %v939, %v1148
        %1150 = vdwg.mxu0
        %1151 = vst [vmem:[%s194] sm:$0xff] %v1056
        %1152 = vst [vmem:[%s194 + $0x8] sm:$0xff] %v1059
        %1153 = vst [vmem:[%s194 + $0x10] sm:$0xff] %v1062
        %1154 = vst [vmem:[%s194 + $0x18] sm:$0xff] %v1065
        %1155 = vst [vmem:[%s194 + $0x20] sm:$0xff] %v1068
        %1156 = vst [vmem:[%s194 + $0x28] sm:$0xff] %v1071
        %1157 = vst [vmem:[%s194 + $0x30] sm:$0xff] %v1074
        %1158 = vst [vmem:[%s194 + $0x38] sm:$0xff] %v1077
        %1159 = vst [vmem:[%s194 + $0x40] sm:$0xff] %v1080
        %1160 = vst [vmem:[%s194 + $0x48] sm:$0xff] %v1083
        %1161 = vst [vmem:[%s194 + $0x50] sm:$0xff] %v1086
        %1162 = vst [vmem:[%s194 + $0x58] sm:$0xff] %v1089
        %1163 = vst [vmem:[%s194 + $0x60] sm:$0xff] %v1092
        %1164 = vst [vmem:[%s194 + $0x68] sm:$0xff] %v1095
        %1165 = vst [vmem:[%s194 + $0x70] sm:$0xff] %v1098
        %1166 = vst [vmem:[%s194 + $0x78] sm:$0xff] %v1101
        %1167 = vst [vmem:[%s194 + $0x80] sm:$0xff] %v1104
        %1168 = vst [vmem:[%s194 + $0x88] sm:$0xff] %v1107
        %1169 = vst [vmem:[%s194 + $0x90] sm:$0xff] %v1110
        %1170 = vst [vmem:[%s194 + $0x98] sm:$0xff] %v1113
        %1171 = vst [vmem:[%s194 + $0xa0] sm:$0xff] %v1116
        %1172 = vst [vmem:[%s194 + $0xa8] sm:$0xff] %v1119
        %1173 = vst [vmem:[%s194 + $0xb0] sm:$0xff] %v1122
        %1174 = vst [vmem:[%s194 + $0xb8] sm:$0xff] %v1125
        %1175 = vst [vmem:[%s194 + $0xc0] sm:$0xff] %v1128
        %1176 = vst [vmem:[%s194 + $0xc8] sm:$0xff] %v1131
        %1177 = vst [vmem:[%s194 + $0xd0] sm:$0xff] %v1134
        %1178 = vst [vmem:[%s194 + $0xd8] sm:$0xff] %v1137
        %1179 = vst [vmem:[%s194 + $0xe0] sm:$0xff] %v1140
        %1180 = vst [vmem:[%s194 + $0xe8] sm:$0xff] %v1143
        %1181 = vst [vmem:[%s194 + $0xf0] sm:$0xff] %v1146
        %1182 = vst [vmem:[%s194 + $0xf8] sm:$0xff] %v1149
        %v1183 = vadd.f32 %v1056, %v1059
        %v1184 = vadd.f32 %v1183, %v1062
        %v1185 = vadd.f32 %v1184, %v1065
        %v1186 = vadd.f32 %v1185, %v1068
        %v1187 = vadd.f32 %v1186, %v1071
        %v1188 = vadd.f32 %v1187, %v1074
        %v1189 = vadd.f32 %v1188, %v1077
        %v1190 = vadd.f32 %v1189, %v1080
        %v1191 = vadd.f32 %v1190, %v1083
        %v1192 = vadd.f32 %v1191, %v1086
        %v1193 = vadd.f32 %v1192, %v1089
        %v1194 = vadd.f32 %v1193, %v1092
        %v1195 = vadd.f32 %v1194, %v1095
        %v1196 = vadd.f32 %v1195, %v1098
        %v1197 = vadd.f32 %v1196, %v1101
        %v1198 = vadd.f32 %v1197, %v1104
        %v1199 = vadd.f32 %v1198, %v1107
        %v1200 = vadd.f32 %v1199, %v1110
        %v1201 = vadd.f32 %v1200, %v1113
        %v1202 = vadd.f32 %v1201, %v1116
        %v1203 = vadd.f32 %v1202, %v1119
        %v1204 = vadd.f32 %v1203, %v1122
        %v1205 = vadd.f32 %v1204, %v1125
        %v1206 = vadd.f32 %v1205, %v1128
        %v1207 = vadd.f32 %v1206, %v1131
        %v1208 = vadd.f32 %v1207, %v1134
        %v1209 = vadd.f32 %v1208, %v1137
        %v1210 = vadd.f32 %v1209, %v1140
        %v1211 = vadd.f32 %v1210, %v1143
        %v1212 = vadd.f32 %v1211, %v1146
        %v1213 = vadd.f32 %v1212, %v1149
        %v1214 = vrot.slane %v1213, 4
        %v1215 = vadd.f32 %v1213, %v1214
        %v1216 = vrot.slane %v1215, 2
        %v1217 = vadd.f32 %v1215, %v1216
        %v1218 = vrot.slane %v1217, 1
        %v1219 = vadd.f32 %v1217, %v1218
        %v1220 = vmul.f32 %v1056, %v1056
        %v1221 = vmul.f32 %v1059, %v1059
        %v1222 = vmul.f32 %v1062, %v1062
        %v1223 = vmul.f32 %v1065, %v1065
        %v1224 = vmul.f32 %v1068, %v1068
        %v1225 = vmul.f32 %v1071, %v1071
        %v1226 = vmul.f32 %v1074, %v1074
        %v1227 = vmul.f32 %v1077, %v1077
        %v1228 = vmul.f32 %v1080, %v1080
        %v1229 = vmul.f32 %v1083, %v1083
        %v1230 = vmul.f32 %v1086, %v1086
        %v1231 = vmul.f32 %v1089, %v1089
        %v1232 = vmul.f32 %v1092, %v1092
        %v1233 = vmul.f32 %v1095, %v1095
        %v1234 = vmul.f32 %v1098, %v1098
        %v1235 = vmul.f32 %v1101, %v1101
        %v1236 = vmul.f32 %v1104, %v1104
        %v1237 = vmul.f32 %v1107, %v1107
        %v1238 = vmul.f32 %v1110, %v1110
        %v1239 = vmul.f32 %v1113, %v1113
        %v1240 = vmul.f32 %v1116, %v1116
        %v1241 = vmul.f32 %v1119, %v1119
        %v1242 = vmul.f32 %v1122, %v1122
        %v1243 = vmul.f32 %v1125, %v1125
        %v1244 = vmul.f32 %v1128, %v1128
        %v1245 = vmul.f32 %v1131, %v1131
        %v1246 = vmul.f32 %v1134, %v1134
        %v1247 = vmul.f32 %v1137, %v1137
        %v1248 = vmul.f32 %v1140, %v1140
        %v1249 = vmul.f32 %v1143, %v1143
        %v1250 = vmul.f32 %v1146, %v1146
        %v1251 = vmul.f32 %v1149, %v1149
        %v1252 = vadd.f32 %v1220, %v1221
        %v1253 = vadd.f32 %v1252, %v1222
        %v1254 = vadd.f32 %v1253, %v1223
        %v1255 = vadd.f32 %v1254, %v1224
        %v1256 = vadd.f32 %v1255, %v1225
        %v1257 = vadd.f32 %v1256, %v1226
        %v1258 = vadd.f32 %v1257, %v1227
        %v1259 = vadd.f32 %v1258, %v1228
        %v1260 = vadd.f32 %v1259, %v1229
        %v1261 = vadd.f32 %v1260, %v1230
        %v1262 = vadd.f32 %v1261, %v1231
        %v1263 = vadd.f32 %v1262, %v1232
        %v1264 = vadd.f32 %v1263, %v1233
        %v1265 = vadd.f32 %v1264, %v1234
        %v1266 = vadd.f32 %v1265, %v1235
        %v1267 = vadd.f32 %v1266, %v1236
        %v1268 = vadd.f32 %v1267, %v1237
        %v1269 = vadd.f32 %v1268, %v1238
        %v1270 = vadd.f32 %v1269, %v1239
        %v1271 = vadd.f32 %v1270, %v1240
        %v1272 = vadd.f32 %v1271, %v1241
        %v1273 = vadd.f32 %v1272, %v1242
        %v1274 = vadd.f32 %v1273, %v1243
        %v1275 = vadd.f32 %v1274, %v1244
        %v1276 = vadd.f32 %v1275, %v1245
        %v1277 = vadd.f32 %v1276, %v1246
        %v1278 = vadd.f32 %v1277, %v1247
        %v1279 = vadd.f32 %v1278, %v1248
        %v1280 = vadd.f32 %v1279, %v1249
        %v1281 = vadd.f32 %v1280, %v1250
        %v1282 = vadd.f32 %v1281, %v1251
        %v1283 = vrot.slane %v1282, 4
        %v1284 = vadd.f32 %v1282, %v1283
        %v1285 = vrot.slane %v1284, 2
        %v1286 = vadd.f32 %v1284, %v1285
        %v1287 = vrot.slane %v1286, 1
        %v1288 = vadd.f32 %v1286, %v1287
        %vm1289 = vcmask 1040384
        %v1290 = vsel %vm1289, %v1219, %v1288
        %1291 = vst [vmem:[%s201] sm:$0x3] %v1290
        %s1292 = sand.u32 %s98, 1
        %s1293 = scalar_lea.sflag [#allocation4], %s1292
        %s1294 = sand.u32 %s98, 1
        %s1295 = smul.addr %s1294, 256
        %s1296 = scalar_lea.vmem [#allocation3], %s1295
        %s1297 = sand.u32 %s124, 1
        %s1298 = scalar_lea.sflag [#allocation6], %s1297
        %s1299 = sand.u32 %s124, 1
        %s1300 = smul.addr %s1299, 2
        %s1301 = scalar_lea.vmem [#allocation5], %s1300
        // Predicated region
        $region33: #{tpu_custom_call.1} parent=31 // pred_check
          %p1302 = pneg %p108
        $region34: #{tpu_custom_call.1} parent=31 // pred_check_branch
          %1304 = sbr.rel (%p1302) target = $region36
        $region35: #{tpu_custom_call.1} parent=31 // pred_region
          %1306 = vsyncadd %s1293, 0
          %s1307 = smul.addr %s22, 32
          %s1308 = smul.addr %s1307, 8
          %s1309 = scalar_lea.hbm %s3, %s1308
          %s1310 = sshll.u32 %s1296, 4
          %s1311 = int_to_ptr.vmem [resolvable:$true] %s1310
          %s1312 = sshll.u32 %s1309, 4
          %s1313 = int_to_ptr.hbm [resolvable:$true] %s1312
          %1318 = dma.vmem_to_hbm [thread:$0]  %s1311, 4096, %s1313, %s1293, 128, 128, 8
        $region36: #{tpu_custom_call.1} parent=31 // pred_fallthru
          _
        // Predicated region
        $region37: #{tpu_custom_call.1} parent=31 // pred_check
          %p1319 = pneg %p134
        $region38: #{tpu_custom_call.1} parent=31 // pred_check_branch
          %1321 = sbr.rel (%p1319) target = $region40
        $region39: #{tpu_custom_call.1} parent=31 // pred_region
          %1323 = vsyncadd %s1298, 0
          %s1324 = smul.addr %s22, 2
          %s1325 = scalar_lea.hbm %s4, %s1324
          %s1327 = sshll.u32 %s1301, 4
          %s1328 = int_to_ptr.vmem [resolvable:$true] %s1327
          %s1329 = sshll.u32 %s1325, 4
          %s1330 = int_to_ptr.hbm [resolvable:$true] %s1329
          %1332 = dma.vmem_to_hbm [thread:$0]  %s1328, 32, %s1330, %s1298
        $region40: #{tpu_custom_call.1} parent=31 // pred_fallthru
          _
      $region32: #{tpu_custom_call.1} parent=5 // pred_fallthru
        _
      %p1333 = scmp.le.s32.totalorder 2, %s17
      // Predicated region
      $region41: #{tpu_custom_call.1} parent=5 // pred_check
        %p1334 = pneg %p1333
      $region42: #{tpu_custom_call.1} parent=5 // pred_check_branch
        %1336 = sbr.rel (%p1334) target = $region44
      $region43: #{tpu_custom_call.1} parent=5 // pred_region
        %s1337 = ssub.s32 %s17, 2
        // Predicated region
        $region45: #{tpu_custom_call.1} parent=43 // pred_check
          %p1338 = pneg %p114
        $region46: #{tpu_custom_call.1} parent=43 // pred_check_branch
          %1340 = sbr.rel (%p1338) target = $region48
        $region47: #{tpu_custom_call.1} parent=43 // pred_region
          %s1341 = sand.u32 %s99, 1
          %s1342 = scalar_lea.sflag [#allocation4], %s1341
          %s1343 = sand.u32 %s99, 1
          %s1344 = smul.addr %s1343, 256
          %s1345 = scalar_lea.vmem [#allocation3], %s1344
          %1347 = dma.done %s1342, 4096
        $region48: #{tpu_custom_call.1} parent=43 // pred_fallthru
          _
        // Predicated region
        $region49: #{tpu_custom_call.1} parent=43 // pred_check
          %p1348 = pneg %p140
        $region50: #{tpu_custom_call.1} parent=43 // pred_check_branch
          %1350 = sbr.rel (%p1348) target = $region52
        $region51: #{tpu_custom_call.1} parent=43 // pred_region
          %s1351 = sand.u32 %s125, 1
          %s1352 = scalar_lea.sflag [#allocation6], %s1351
          %s1353 = sand.u32 %s125, 1
          %s1354 = smul.addr %s1353, 2
          %s1355 = scalar_lea.vmem [#allocation5], %s1354
          %1357 = dma.done %s1352, 32
        $region52: #{tpu_custom_call.1} parent=43 // pred_fallthru
          _
      $region44: #{tpu_custom_call.1} parent=5 // pred_fallthru
        _
    $region6: #{tpu_custom_call.1} parent=1 // loop_footer
      %s21 = sadd.s32 1, %s17
    $region7: #{tpu_custom_call.1} parent=1 // loop_footer_branch
      %16 = sbr.rel target = $region3
    $region8: #{tpu_custom_call.1} parent=1 // loop_exit
      _
    %1358 = vsyncpa [#allocation4], 1
    %s1359 = scalar_lea.sflag [#allocation4], 1
    %1360 = vsyncpa %s1359, 1
    %1361 = vsyncpa [#allocation6], 1
    %s1362 = scalar_lea.sflag [#allocation6], 1
    %1363 = vsyncpa %s1362, 1

</llo_original>
